<compile_context>
chip_gen: v5e
topology: v5e:2x2
jax: 0.10.0
libtpu: 0.0.40
codegen_flags: <defaults>
</compile_context>

<pallas_src>
import jax
import jax.numpy as jnp
from jax.experimental import pallas as pl
from jax.experimental.pallas import tpu as pltpu

LANE = 128
SUBLANE = 8


def mlp_kernel(x_ref, w1_ref, b1_ref, w2_ref, b2_ref, o_ref):
    # Fused: matmul -> bias -> ReLU -> matmul -> bias. Both dots accumulate in f32 on the MXU.
    x = x_ref[...]
    h = jnp.dot(x, w1_ref[...], preferred_element_type=jnp.float32) + b1_ref[...]
    h = jnp.maximum(h, 0.0)
    # Keep h in f32; if w2 is stored bf16 it is promoted in-kernel (better precision than
    # casting h down, and the MXU is >90% idle here anyway).
    y = jnp.dot(h, w2_ref[...].astype(jnp.float32),
                preferred_element_type=jnp.float32) + b2_ref[...]
    o_ref[...] = y.astype(o_ref.dtype)


def prepare_params(w1, b1, w2, b2, *, weights_dtype=jnp.float32, lane=LANE):
    """One-time, host-side param prep (store the result; do NOT call per forward).

    Zero-pads the hidden dim up to a full 128-lane width (numerically exact: ReLU(0+0)=0 and
    zero rows of w2 contribute 0) and optionally stores weights in bf16. Biases stay f32.
    """
    d_in, d_hid = w1.shape
    d_out = w2.shape[1]
    hp = max(lane, ((d_hid + lane - 1) // lane) * lane)
    w1p = jnp.zeros((d_in, hp), jnp.float32).at[:, :d_hid].set(
        w1.astype(jnp.float32)).astype(weights_dtype)
    b1p = jnp.zeros((1, hp), jnp.float32).at[:, :d_hid].set(
        b1.reshape(1, d_hid).astype(jnp.float32))
    w2p = jnp.zeros((hp, d_out), jnp.float32).at[:d_hid, :].set(
        w2.astype(jnp.float32)).astype(weights_dtype)
    b2p = b2.reshape(1, d_out).astype(jnp.float32)
    return w1p, b1p, w2p, b2p


def simple_mlp_forward(x, params, *, block_b=4096, out_dtype=jnp.float32):
    """Forward pass. `params` = prepare_params(...) output. x dtype is used as-is (f32 or bf16)."""
    w1p, b1p, w2p, b2p = params
    B, D_in = x.shape
    Hp = w1p.shape[1]
    D_out = w2p.shape[1]
    out_itemsize = jnp.dtype(out_dtype).itemsize

    cost = pl.CostEstimate(
        flops=2 * B * (D_in * Hp + Hp * D_out),
        transcendentals=0,
        bytes_accessed=(x.size * x.dtype.itemsize
                        + w1p.size * w1p.dtype.itemsize + b1p.size * 4
                        + w2p.size * w2p.dtype.itemsize + b2p.size * 4
                        + B * D_out * out_itemsize),
    )
    out_shape = jax.ShapeDtypeStruct((B, D_out), out_dtype)

    if B <= block_b:
        # No grid, no pipeline machinery: one VMEM-resident block per operand. Compute is
        # <10% of DMA time, so losing DMA/compute overlap costs ~nothing.
        return pl.pallas_call(
            mlp_kernel,
            out_shape=out_shape,
            in_specs=[pl.BlockSpec(memory_space=pltpu.MemorySpace.VMEM)] * 5,
            out_specs=pl.BlockSpec(memory_space=pltpu.MemorySpace.VMEM),
            cost_estimate=cost,
        )(x, w1p, b1p, w2p, b2p)

    # Batched path: 1-D grid over B. Weights/biases use constant index maps (VMEM-resident,
    # no re-DMA). Ensure >= 2 near-balanced steps so the "parallel" axis shards across v7x's
    # two TensorCores (no-op on v5e/v6e).
    half_rounded = ((B + 1) // 2 + SUBLANE - 1) // SUBLANE * SUBLANE
    tb = min(block_b, half_rounded)
    grid = (pl.cdiv(B, tb),)

    # VMEM budget: double-buffered x/out tiles + f32 hidden intermediate + resident weights.
    # Raise the scoped limit only if we exceed the conservative v5e default (16 MiB); cap
    # below v7x's 64 MiB physical VMEM.
    est_bytes = (2 * tb * D_in * x.dtype.itemsize
                 + 2 * tb * D_out * out_itemsize
                 + tb * Hp * 4 + tb * D_out * 4
                 + 2 * (w1p.size * w1p.dtype.itemsize + w2p.size * w2p.dtype.itemsize
                        + (b1p.size + b2p.size) * 4))
    vmem_limit = None
    if est_bytes > 12 * 1024 * 1024:
        vmem_limit = min(int(est_bytes * 1.5), 60 * 1024 * 1024)

    return pl.pallas_call(
        mlp_kernel,
        out_shape=out_shape,
        grid=grid,
        in_specs=[
            pl.BlockSpec((tb, D_in), lambda i: (i, 0)),
            pl.BlockSpec((D_in, Hp), lambda i: (0, 0)),
            pl.BlockSpec((1, Hp), lambda i: (0, 0)),
            pl.BlockSpec((Hp, D_out), lambda i: (0, 0)),
            pl.BlockSpec((1, D_out), lambda i: (0, 0)),
        ],
        out_specs=pl.BlockSpec((tb, D_out), lambda i: (i, 0)),
        compiler_params=pltpu.CompilerParams(
            dimension_semantics=("parallel",),
            vmem_limit_bytes=vmem_limit,
        ),
        cost_estimate=cost,
    )(x, w1p, b1p, w2p, b2p)


def init_params(key, input_dim=64, hidden_dim=32, output_dim=10):
    # Deterministic init mimicking PyTorch nn.Linear default: U(-1/sqrt(fan_in), +1/sqrt(fan_in)).
    k1, k2, k3, k4 = jax.random.split(key, 4)
    bound1 = 1.0 / jnp.sqrt(input_dim)
    bound2 = 1.0 / jnp.sqrt(hidden_dim)
    w1 = jax.random.uniform(k1, (input_dim, hidden_dim), jnp.float32, -bound1, bound1)
    b1 = jax.random.uniform(k2, (1, hidden_dim), jnp.float32, -bound1, bound1)
    w2 = jax.random.uniform(k3, (hidden_dim, output_dim), jnp.float32, -bound2, bound2)
    b2 = jax.random.uniform(k4, (1, output_dim), jnp.float32, -bound2, bound2)
    return w1, b1, w2, b2


def _reference(x, w1, b1, w2, b2):
    return jnp.maximum(x.astype(jnp.float32) @ w1 + b1, 0.0) @ w2 + b2


if __name__ == "__main__":
    key = jax.random.PRNGKey(0)
    k_x, k_p, k_xl, k_xr = jax.random.split(key, 4)

    D_in, D_hid, D_out = 64, 32, 10
    w1, b1, w2, b2 = init_params(k_p, D_in, D_hid, D_out)

    # Params prepared ONCE (pad hidden dim; optionally store bf16 weights).
    params_f32 = prepare_params(w1, b1, w2, b2)
    params_bf16 = prepare_params(w1, b1, w2, b2, weights_dtype=jnp.bfloat16)

    # 1) Small batch -> no-grid path, f32 (matches the original module shapes).
    B_small = 8
    x_small = jax.random.normal(k_x, (B_small, D_in), jnp.float32)
    out_small = jax.block_until_ready(simple_mlp_forward(x_small, params_f32))
    ref_small = _reference(x_small, w1, b1, w2, b2)
    assert out_small.shape == (B_small, D_out)
    assert jnp.allclose(out_small, ref_small, atol=1e-5, rtol=1e-5)

    # 2) Grid path, exact tile multiple (block_b forced small so the grid actually runs).
    B_big, TB = 1024, 512
    x_big = jax.random.normal(k_xl, (B_big, D_in), jnp.float32)
    out_big = jax.block_until_ready(simple_mlp_forward(x_big, params_f32, block_b=TB))
    ref_big = _reference(x_big, w1, b1, w2, b2)
    assert out_big.shape == (B_big, D_out)
    assert jnp.allclose(out_big, ref_big, atol=1e-5, rtol=1e-5)

    # 3) Ragged last tile: B % tile != 0 (B=1000 -> tb=504, grid=2, last block partial).
    B_rag = 1000
    x_rag = jax.random.normal(k_xr, (B_rag, D_in), jnp.float32)
    out_rag = jax.block_until_ready(simple_mlp_forward(x_rag, params_f32, block_b=TB))
    ref_rag = _reference(x_rag, w1, b1, w2, b2)
    assert out_rag.shape == (B_rag, D_out)
    assert jnp.allclose(out_rag, ref_rag, atol=1e-5, rtol=1e-5)

    # 4) bf16 path: caller already holds bf16 activations + bf16-stored weights + bf16 output.
    #    No wrapper-side cast inside the forward path; the kernel accumulates in f32.
    x_bf16 = x_big.astype(jnp.bfloat16)  # simulates a caller whose activations are natively bf16
    out_bf16 = jax.block_until_ready(
        simple_mlp_forward(x_bf16, params_bf16, block_b=TB, out_dtype=jnp.bfloat16))
    assert out_bf16.shape == (B_big, D_out)
    assert bool(jnp.all(jnp.isfinite(out_bf16.astype(jnp.float32))))
    assert jnp.allclose(out_bf16.astype(jnp.float32), ref_big, atol=2e-1, rtol=2e-1)

    print("KERNEL_OK")
</pallas_src>

<mosaic_0001>
module attributes {stable_mosaic.version = 11 : i64} {
  func.func @mlp_kernel(%arg0: memref<8x64xf32, #tpu.memory_space<vmem>>, %arg1: memref<64x128xf32, #tpu.memory_space<vmem>>, %arg2: memref<1x128xf32, #tpu.memory_space<vmem>>, %arg3: memref<128x10xf32, #tpu.memory_space<vmem>>, %arg4: memref<1x10xf32, #tpu.memory_space<vmem>>, %arg5: memref<8x10xf32, #tpu.memory_space<vmem>>) attributes {dimension_semantics = [], scalar_prefetch = 0 : i64, scratch_operands = 0 : i64, tpu.core_type = #tpu.core_type<tc>} {
    %c0 = arith.constant 0 : index
    %c0_0 = arith.constant 0 : index
    %0 = vector.load %arg0[%c0, %c0_0] : memref<8x64xf32, #tpu.memory_space<vmem>>, vector<8x64xf32>
    %c0_1 = arith.constant 0 : index
    %c0_2 = arith.constant 0 : index
    %1 = vector.load %arg1[%c0_1, %c0_2] : memref<64x128xf32, #tpu.memory_space<vmem>>, vector<64x128xf32>
    %cst = arith.constant dense<0.000000e+00> : vector<8x128xf32>
    %2 = tpu.matmul %0, %1, %cst {dimension_numbers = #tpu.dot_dimension_numbers<[1], [0], [0], [1], [0, 0, 1, 1], [], []>} : vector<8x64xf32>, vector<64x128xf32>, vector<8x128xf32> -> vector<8x128xf32>
    %c0_3 = arith.constant 0 : index
    %c0_4 = arith.constant 0 : index
    %3 = vector.load %arg2[%c0_3, %c0_4] : memref<1x128xf32, #tpu.memory_space<vmem>>, vector<1x128xf32>
    %4 = vector.broadcast %3 : vector<1x128xf32> to vector<8x128xf32>
    %5 = arith.addf %2, %4 : vector<8x128xf32>
    %cst_5 = arith.constant 0.000000e+00 : f32
    %6 = vector.broadcast %cst_5 : f32 to vector<8x128xf32>
    %7 = arith.maximumf %5, %6 : vector<8x128xf32>
    %c0_6 = arith.constant 0 : index
    %c0_7 = arith.constant 0 : index
    %8 = vector.load %arg3[%c0_6, %c0_7] : memref<128x10xf32, #tpu.memory_space<vmem>>, vector<128x10xf32>
    %cst_8 = arith.constant dense<0.000000e+00> : vector<8x10xf32>
    %9 = tpu.matmul %7, %8, %cst_8 {dimension_numbers = #tpu.dot_dimension_numbers<[1], [0], [0], [1], [0, 0, 1, 1], [], []>} : vector<8x128xf32>, vector<128x10xf32>, vector<8x10xf32> -> vector<8x10xf32>
    %c0_9 = arith.constant 0 : index
    %c0_10 = arith.constant 0 : index
    %10 = vector.load %arg4[%c0_9, %c0_10] : memref<1x10xf32, #tpu.memory_space<vmem>>, vector<1x10xf32>
    %11 = vector.broadcast %10 : vector<1x10xf32> to vector<8x10xf32>
    %12 = arith.addf %9, %11 : vector<8x10xf32>
    %c0_11 = arith.constant 0 : index
    %c0_12 = arith.constant 0 : index
    %13 = vector.load %arg5[%c0_11, %c0_12] : memref<8x10xf32, #tpu.memory_space<vmem>>, vector<8x10xf32>
    tpu.vector_store %arg5[%c0_11, %c0_12], %12 {strides = array<i32>} : memref<8x10xf32, #tpu.memory_space<vmem>>, vector<8x10xf32>,
    return
  }
}

</mosaic_0001>

<llo_original>
// kernel: tpu_custom_call.1
$region0: #{tpu_custom_call.1}
  #allocation0 [shape = 'u32[]', space=smem, size = 0x4, offset = 0x4, fixed_abs, tag = 'smem constant byte address 0x4 - core index']
  #allocation1 [shape = 'u32[72,128]{1,0:T(1,128)}', space=vmem, size = 0x9000, scoped, tag = 'internal scratch']
  %s0 = inlined_call_operand.vmem [shape: f32[8,64], index: 0, kind: input, shape index: {}]
  %s1 = inlined_call_operand.vmem [shape: f32[64,128], index: 1, kind: input, shape index: {}]
  %s2 = inlined_call_operand.vmem [shape: f32[1,128], index: 2, kind: input, shape index: {}]
  %s3 = inlined_call_operand.vmem [shape: f32[128,10], index: 3, kind: input, shape index: {}]
  %s4 = inlined_call_operand.vmem [shape: f32[1,10], index: 4, kind: input, shape index: {}]
  %s5 = inlined_call_operand.hbm [shape: f32[8,10], index: 5, kind: output, shape index: {}]
  %s6 = sld [smem:[#allocation0]]
  $region30: #{tpu_custom_call.1} parent=0
    _
  %s8 = ssub.s32 1, %s6
  %s9 = scalar_select 0, %s8, %s6
  $region1: #{tpu_custom_call.1} parent=0
    #allocation2 [shape = 'u8[4096]{0}', space=vmem, size = 0x1000, scoped, tag = 'output window, operand 0, single buffered']
    #allocation3 [shape = 's32[1]{0}', space=sflag, size = 0x4, scoped, tag = 'scoped memory for tpu_custom_call.1']
    %10 = vsyncpa [#allocation3], 0
    // Predicated region
    $region2: #{tpu_custom_call.1} parent=1 // pred_check
      _
    $region3: #{tpu_custom_call.1} parent=1 // pred_check_branch
      %12 = sbr.rel (0) target = $region5
    $region4: #{tpu_custom_call.1} parent=1 // pred_region
      _
    $region5: #{tpu_custom_call.1} parent=1 // pred_fallthru
      _
    // Predicated region
    $region6: #{tpu_custom_call.1} parent=1 // pred_check
      _
    $region7: #{tpu_custom_call.1} parent=1 // pred_check_branch
      %14 = sbr.rel (0) target = $region9
    $region8: #{tpu_custom_call.1} parent=1 // pred_region
      _
    $region9: #{tpu_custom_call.1} parent=1 // pred_fallthru
      _
    // Predicated region
    $region10: #{tpu_custom_call.1} parent=1 // pred_check
      _
    $region11: #{tpu_custom_call.1} parent=1 // pred_check_branch
      %16 = sbr.rel (0) target = $region13
    $region12: #{tpu_custom_call.1} parent=1 // pred_region
      _
    $region13: #{tpu_custom_call.1} parent=1 // pred_fallthru
      _
    // Predicated region
    $region14: #{tpu_custom_call.1} parent=1 // pred_check
      _
    $region15: #{tpu_custom_call.1} parent=1 // pred_check_branch
      %18 = sbr.rel (0) target = $region17
    $region16: #{tpu_custom_call.1} parent=1 // pred_region
      _
    $region17: #{tpu_custom_call.1} parent=1 // pred_fallthru
      _
    // Predicated region
    $region18: #{tpu_custom_call.1} parent=1 // pred_check
      _
    $region19: #{tpu_custom_call.1} parent=1 // pred_check_branch
      %20 = sbr.rel (0) target = $region21
    $region20: #{tpu_custom_call.1} parent=1 // pred_region
      _
    $region21: #{tpu_custom_call.1} parent=1 // pred_fallthru
      _
    %v21 = vld [vmem:[%s0] sm:$0xff]
    %v22 = vld [vmem:[%s1] sm:$0xff]
    %v23 = vld [vmem:[%s1 + $0x8] sm:$0xff]
    %v24 = vld [vmem:[%s1 + $0x10] sm:$0xff]
    %v25 = vld [vmem:[%s1 + $0x18] sm:$0xff]
    %v26 = vld [vmem:[%s1 + $0x20] sm:$0xff]
    %v27 = vld [vmem:[%s1 + $0x28] sm:$0xff]
    %v28 = vld [vmem:[%s1 + $0x30] sm:$0xff]
    %v29 = vld [vmem:[%s1 + $0x38] sm:$0xff]
    %v30 = vld [vmem:[%s2] sm:$0x1]
    %v32 = vperm.slane %v30, 0
    %vm34 = vcmask 523264
    %v36 = vsel %vm34, %v21, 0
    %38 = vmatpush.msra.mxu0 0.0
    %39 = vmatpush.msra.mxu0 0.0
    %40 = vmatpush.msra.mxu0 0.0
    %41 = vmatpush.msra.mxu0 0.0
    %42 = vmatpush.msra.mxu0 0.0
    %43 = vmatpush.msra.mxu0 0.0
    %44 = vmatpush.msra.mxu0 0.0
    %45 = vmatpush.msra.mxu0 0.0
    %46 = vmatpush.msra.mxu0 %v29
    %47 = vmatpush.msra.mxu0 %v28
    %48 = vmatpush.msra.mxu0 %v27
    %49 = vmatpush.msra.mxu0 %v26
    %50 = vmatpush.msra.mxu0 %v25
    %51 = vmatpush.msra.mxu0 %v24
    %52 = vmatpush.msra.mxu0 %v23
    %53 = vmatpush.msra.mxu0 %v22
    %54 = vmatmul.f32.gmra.mxu0 %v36
    %v55 = vpop.f32.mrf.mxu0
    %v56 = vadd.f32 %v32, %v55
    %57 = vdwg.mxu0
    %v58 = vmax.f32 %v56, 0.0
    %v59 = vld [vmem:[%s3] sm:$0xff]
    %v60 = vld [vmem:[%s3 + $0x8] sm:$0xff]
    %v61 = vld [vmem:[%s3 + $0x10] sm:$0xff]
    %v62 = vld [vmem:[%s3 + $0x18] sm:$0xff]
    %v63 = vld [vmem:[%s3 + $0x20] sm:$0xff]
    %v64 = vld [vmem:[%s3 + $0x28] sm:$0xff]
    %v65 = vld [vmem:[%s3 + $0x30] sm:$0xff]
    %v66 = vld [vmem:[%s3 + $0x38] sm:$0xff]
    %v67 = vld [vmem:[%s3 + $0x40] sm:$0xff]
    %v68 = vld [vmem:[%s3 + $0x48] sm:$0xff]
    %v69 = vld [vmem:[%s3 + $0x50] sm:$0xff]
    %v70 = vld [vmem:[%s3 + $0x58] sm:$0xff]
    %v71 = vld [vmem:[%s3 + $0x60] sm:$0xff]
    %v72 = vld [vmem:[%s3 + $0x68] sm:$0xff]
    %v73 = vld [vmem:[%s3 + $0x70] sm:$0xff]
    %v74 = vld [vmem:[%s3 + $0x78] sm:$0xff]
    %v75 = vld [vmem:[%s4] sm:$0x1]
    %v77 = vperm.slane %v75, 0
    %79 = vmatpush.msra.mxu0 %v74
    %80 = vmatpush.msra.mxu0 %v73
    %81 = vmatpush.msra.mxu0 %v72
    %82 = vmatpush.msra.mxu0 %v71
    %83 = vmatpush.msra.mxu0 %v70
    %84 = vmatpush.msra.mxu0 %v69
    %85 = vmatpush.msra.mxu0 %v68
    %86 = vmatpush.msra.mxu0 %v67
    %87 = vmatpush.msra.mxu0 %v66
    %88 = vmatpush.msra.mxu0 %v65
    %89 = vmatpush.msra.mxu0 %v64
    %90 = vmatpush.msra.mxu0 %v63
    %91 = vmatpush.msra.mxu0 %v62
    %92 = vmatpush.msra.mxu0 %v61
    %93 = vmatpush.msra.mxu0 %v60
    %94 = vmatpush.msra.mxu0 %v59
    %95 = vmatmul.f32.gmra.mxu0 %v58
    %v96 = vpop.f32.mrf.mxu0
    %v97 = vadd.f32 %v77, %v96
    %98 = vdwg.mxu0
    %vm99 = vcmask 80896
    %100 = vst.msk [vmem:[#allocation2] sm:$0xff] %vm99, %v97
    // Predicated region
    $region22: #{tpu_custom_call.1} parent=1 // pred_check
      _
    $region23: #{tpu_custom_call.1} parent=1 // pred_check_branch
      %102 = sbr.rel (0) target = $region25
    $region24: #{tpu_custom_call.1} parent=1 // pred_region
      %104 = vsyncadd [#allocation3], 0
      %s106 = sshll.u32 [#allocation2], 4
      %s107 = int_to_ptr.vmem [resolvable:$true] %s106
      %s108 = sshll.u32 %s5, 4
      %s109 = int_to_ptr.hbm [resolvable:$true] %s108
      %111 = dma.vmem_to_hbm [thread:$0]  %s107, 128, %s109, [#allocation3]
    $region25: #{tpu_custom_call.1} parent=1 // pred_fallthru
      _
    // Predicated region
    $region26: #{tpu_custom_call.1} parent=1 // pred_check
      _
    $region27: #{tpu_custom_call.1} parent=1 // pred_check_branch
      %113 = sbr.rel (0) target = $region29
    $region28: #{tpu_custom_call.1} parent=1 // pred_region
      %115 = dma.done [#allocation3], 128
    $region29: #{tpu_custom_call.1} parent=1 // pred_fallthru
      _
    %116 = vsyncpa [#allocation3], 1

</llo_original>
